<compile_context>
chip_gen: v7x
topology: tpu7x:2x2x1
jax: 0.10.0
libtpu: 0.0.40
codegen_flags: <defaults>
</compile_context>

<pallas_src>
import jax
import jax.numpy as jnp
from jax.experimental import pallas as pl
from jax.experimental.pallas import tpu as pltpu


def _round_up(v, m):
    return ((v + m - 1) // m) * m


def _sublane_multiple(dtype):
    # Sublane (second-minor) granularity per element width.
    itemsize = jnp.dtype(dtype).itemsize
    return {4: 8, 2: 16, 1: 32}.get(itemsize, 8)


def _linear_kernel(x_ref, w_ref, o_ref):
    # out[r, c] = sum_k x[r, k] * w[c, k]  -- rhs contracted on its last dim,
    # so no transposed copy of the weight is ever materialized.
    acc = jax.lax.dot_general(
        x_ref[...],
        w_ref[...],
        dimension_numbers=(((1,), (1,)), ((), ())),
        preferred_element_type=jnp.float32,
    )
    o_ref[...] = acc.astype(o_ref.dtype)


def pack_weight(weight):
    """Build the (lane-packed) block-diagonal weight once at setup time."""
    b_out, b_in = weight.shape
    assert b_out == b_in, "dynamics_back uses a square weight"
    b = b_in
    if b < 128 and 128 % b == 0:
        pack = 128 // b
    else:
        # b >= 128, or b < 128 not dividing 128: no packing.  (For the latter,
        # output stores are lane-masked -- correct but slower; such b are not
        # expected for this module.)
        pack = 1
    if pack > 1:
        # w_bd[b*j + o, b*j + i] = W[o, i]; kernel contracts on the last axis,
        # so this is built from W directly (no weight.T anywhere).
        w_packed = jnp.kron(jnp.eye(pack, dtype=weight.dtype), weight)
    else:
        w_packed = weight
    return w_packed, pack, b


def _dynamics_back_packed(x, w_packed, pack, b, tile_rows):
    """x: (N, b).  Returns x @ W.T via the Pallas kernel."""
    N = x.shape[0]
    bp = b * pack                                   # packed lane width (128 when packing)
    sub = _sublane_multiple(x.dtype)                # 8 (f32) / 16 (bf16) / 32 (i8)

    x_itemsize = jnp.dtype(x.dtype).itemsize
    w_itemsize = jnp.dtype(w_packed.dtype).itemsize

    # ---- packed-row count, aligned only to the sublane granularity ----------
    n_rows = pl.cdiv(N, pack)
    n_rows_al = _round_up(max(n_rows, 1), sub)

    # ---- tile selection ------------------------------------------------------
    # Big tiles for HBM bandwidth, but keep >= ~4 grid steps (v7x megacore +
    # DMA/compute overlap) unless that would shrink the x-tile below ~256 rows.
    tile_r = _round_up(tile_rows, sub)                       # e.g. 4096 rows ≈ 2 MiB f32
    quarter = _round_up(pl.cdiv(n_rows_al, 4), sub)          # aim for >= 4 steps
    tile_r = min(tile_r, max(quarter, _round_up(256, sub)))  # floor ~128 KiB tile
    tile_r = min(tile_r, n_rows_al)
    # Clamp so 2x(in+out) double-buffered tiles stay under ~24 MiB (safe on
    # v7x's 64 MiB/TC physical VMEM, comfortable on v5e/v6e).
    max_tile_r = max(sub, ((24 << 20) // (4 * bp * x_itemsize) // sub) * sub)
    tile_r = min(tile_r, max_tile_r)

    # ---- minimal padding (none when N is already aligned) -------------------
    n_pad = n_rows_al * pack
    if n_pad != N:
        x = jnp.pad(x, ((0, n_pad - N), (0, 0)))
    x_packed = x.reshape(n_rows_al, bp)             # free row-major view

    grid = (pl.cdiv(n_rows_al, tile_r),)            # partial final block handled by Pallas

    # ---- explicit VMEM budget: footprint + headroom, no hard under-cap ------
    tile_bytes = tile_r * bp * x_itemsize
    footprint = 4 * tile_bytes + 2 * bp * bp * w_itemsize   # dbl-buf x & out + dbl-buf W
    vmem_limit = int(min(footprint + (4 << 20), 48 << 20))

    out_packed = pl.pallas_call(
        _linear_kernel,
        out_shape=jax.ShapeDtypeStruct((n_rows_al, bp), x.dtype),
        grid_spec=pltpu.PrefetchScalarGridSpec(
            num_scalar_prefetch=0,
            grid=grid,
            in_specs=[
                pl.BlockSpec((tile_r, bp), lambda i: (i, 0)),   # streaming x tile
                pl.BlockSpec((bp, bp), lambda i: (0, 0)),       # weight, VMEM-resident
            ],
            out_specs=pl.BlockSpec((tile_r, bp), lambda i: (i, 0)),
        ),
        compiler_params=pltpu.CompilerParams(
            dimension_semantics=("parallel",),
            vmem_limit_bytes=vmem_limit,
        ),
    )(x_packed, w_packed)

    # Unpack lanes back to (N, b).
    return out_packed.reshape(n_pad, b)[:N]


def make_dynamics_back(weight, *, tile_rows=4096):
    """Setup-time factory: packs the weight once and returns a jitted forward."""
    w_packed, pack, b = pack_weight(weight)

    @jax.jit
    def forward(x):
        return _dynamics_back_packed(x, w_packed, pack, b, tile_rows)

    return forward


def dynamics_back_forward(x, weight, *, tile_rows=4096):
    """One-shot convenience API (prefer make_dynamics_back for repeated calls)."""
    w_packed, pack, b = pack_weight(weight)
    return _dynamics_back_packed(x, w_packed, pack, b, tile_rows)


if __name__ == "__main__":
    # Deterministic synthetic parameters (init_scheme stand-in) and inputs.
    key = jax.random.PRNGKey(0)
    k_w, k_x = jax.random.split(key)

    b = 32   # latent dimension of the Koopman-style backward dynamics operator
    N = 8    # batch of latent states

    # init_scheme(): deterministic weight of shape (b, b)
    weight = jax.random.normal(k_w, (b, b), dtype=jnp.float32) / jnp.sqrt(b)
    x = jax.random.normal(k_x, (N, b), dtype=jnp.float32)

    fwd = make_dynamics_back(weight)

    out = jax.block_until_ready(fwd(x))

    # Reference check against plain JAX (== PyTorch F.linear(x, weight)).
    ref = x @ weight.T
    assert out.shape == (N, b)
    assert jnp.allclose(out, ref, atol=1e-5, rtol=1e-5)

    # Ragged, larger batch so the multi-step padded/tiled path is hit.
    N2 = 1030
    x2 = jax.random.normal(jax.random.PRNGKey(1), (N2, b), dtype=jnp.float32)
    out2 = jax.block_until_ready(fwd(x2))
    assert out2.shape == (N2, b)
    assert jnp.allclose(out2, x2 @ weight.T, atol=1e-5, rtol=1e-5)

    print("KERNEL_OK")
</pallas_src>

<mosaic_0001>
module attributes {stable_mosaic.version = 11 : i64} {
  func.func @_linear_kernel(%arg0: i32, %arg1: memref<8x128xf32, #tpu.memory_space<vmem>>, %arg2: memref<128x128xf32, #tpu.memory_space<vmem>>, %arg3: memref<8x128xf32, #tpu.memory_space<vmem>>) attributes {dimension_semantics = [#tpu.dimension_semantics<parallel>], iteration_bounds = array<i64: 1>, scalar_prefetch = 0 : i64, scratch_operands = 0 : i64, tpu.core_type = #tpu.core_type<tc>, window_params = [{transform_indices = @transform_0, window_bounds = array<i64: 8, 128>}, {pipeline_mode = #tpu.pipeline_mode<synchronous>, transform_indices = @transform_1, window_bounds = array<i64: 128, 128>}, {transform_indices = @transform_2, window_bounds = array<i64: 8, 128>}]} {
    %c0 = arith.constant 0 : index
    %c0_0 = arith.constant 0 : index
    %0 = vector.load %arg1[%c0, %c0_0] : memref<8x128xf32, #tpu.memory_space<vmem>>, vector<8x128xf32>
    %c0_1 = arith.constant 0 : index
    %c0_2 = arith.constant 0 : index
    %1 = vector.load %arg2[%c0_1, %c0_2] : memref<128x128xf32, #tpu.memory_space<vmem>>, vector<128x128xf32>
    %cst = arith.constant dense<0.000000e+00> : vector<8x128xf32>
    %2 = tpu.matmul %0, %1, %cst {dimension_numbers = #tpu.dot_dimension_numbers<[1], [1], [0], [0], [0, 0, 1, 0], [], []>} : vector<8x128xf32>, vector<128x128xf32>, vector<8x128xf32> -> vector<8x128xf32>
    %c0_3 = arith.constant 0 : index
    %c0_4 = arith.constant 0 : index
    %3 = vector.load %arg3[%c0_3, %c0_4] : memref<8x128xf32, #tpu.memory_space<vmem>>, vector<8x128xf32>
    tpu.vector_store %arg3[%c0_3, %c0_4], %2 {strides = array<i32>} : memref<8x128xf32, #tpu.memory_space<vmem>>, vector<8x128xf32>,
    return
  }
  func.func @transform_0(%arg0: i32) -> (i32, i32) {
    %c0_i32 = arith.constant 0 : i32
    %c0_i32_0 = arith.constant 0 : i32
    return %arg0, %c0_i32 : i32, i32
  }
  func.func @transform_1(%arg0: i32) -> (i32, i32) {
    %c0_i32 = arith.constant 0 : i32
    %c0_i32_0 = arith.constant 0 : i32
    %c0_i32_1 = arith.constant 0 : i32
    return %c0_i32, %c0_i32_0 : i32, i32
  }
  func.func @transform_2(%arg0: i32) -> (i32, i32) {
    %c0_i32 = arith.constant 0 : i32
    %c0_i32_0 = arith.constant 0 : i32
    return %arg0, %c0_i32 : i32, i32
  }
}

</mosaic_0001>

<llo_original>
// kernel: forward.1
$region0: #{forward.1}
  #allocation0 [shape = 'u32[]', space=smem, size = 0x4, offset = 0x4, fixed_abs, tag = 'smem constant byte address 0x4 - core index']
  #allocation1 [shape = 'u32[144,128]{1,0:T(1,128)}', space=vmem, size = 0x12000, scoped, tag = 'internal scratch']
  %s0 = inlined_call_operand.vmem [shape: f32[8,128], index: 0, kind: input, shape index: {}]
  %s1 = inlined_call_operand.hbm [shape: f32[128,128], index: 1, kind: input, shape index: {}]
  %s2 = inlined_call_operand.vmem [shape: f32[8,128], index: 2, kind: output, shape index: {}]
  %s3 = sld [smem:[#allocation0]]
  $region22: #{forward.1} parent=0
    _
  %s5 = ssub.s32 1, %s3
  %s6 = scalar_select 0, %s5, %s3
  $region1: #{forward.1} parent=0
    #allocation2 [shape = 'u8[65536]{0}', space=vmem, size = 0x10000, scoped, tag = 'input window, operand 1, single buffered']
    #allocation3 [shape = 's32[1]{0}', space=sflag, size = 0x4, scoped, tag = 'scoped memory for forward.1']
    %7 = vsyncpa [#allocation3], 0
    // Predicated region
    $region2: #{forward.1} parent=1 // pred_check
      _
    $region3: #{forward.1} parent=1 // pred_check_branch
      %9 = sbr.rel (0) target = $region5
    $region4: #{forward.1} parent=1 // pred_region
      _
    $region5: #{forward.1} parent=1 // pred_fallthru
      _
    // Predicated region
    $region6: #{forward.1} parent=1 // pred_check
      _
    $region7: #{forward.1} parent=1 // pred_check_branch
      %11 = sbr.rel (0) target = $region9
    $region8: #{forward.1} parent=1 // pred_region
      %s13 = ssub.s32 2048, 2048
      %14 = vsyncadd [#allocation3], %s13
      %s15 = sshll.u32 [#allocation2], 4
      %s16 = int_to_ptr.vmem [resolvable:$true] %s15
      %21 = dma.hbm_to_vmem [thread:$0]  %s1, 2048, %s16, [#allocation3], 128, 128, 8
    $region9: #{forward.1} parent=1 // pred_fallthru
      _
    // Predicated region
    $region10: #{forward.1} parent=1 // pred_check
      _
    $region11: #{forward.1} parent=1 // pred_check_branch
      %23 = sbr.rel (0) target = $region13
    $region12: #{forward.1} parent=1 // pred_region
      %24 = dma.done [#allocation3], 2048
    $region13: #{forward.1} parent=1 // pred_fallthru
      _
    %v25 = vld [vmem:[%s0] sm:$0xff]
    %v26 = vld [vmem:[#allocation2] sm:$0xff]
    %v27 = vld [vmem:[#allocation2 + $0x8] sm:$0xff]
    %v28 = vld [vmem:[#allocation2 + $0x10] sm:$0xff]
    %v29 = vld [vmem:[#allocation2 + $0x18] sm:$0xff]
    %v30 = vld [vmem:[#allocation2 + $0x20] sm:$0xff]
    %v31 = vld [vmem:[#allocation2 + $0x28] sm:$0xff]
    %v32 = vld [vmem:[#allocation2 + $0x30] sm:$0xff]
    %v33 = vld [vmem:[#allocation2 + $0x38] sm:$0xff]
    %v34 = vld [vmem:[#allocation2 + $0x40] sm:$0xff]
    %v35 = vld [vmem:[#allocation2 + $0x48] sm:$0xff]
    %v36 = vld [vmem:[#allocation2 + $0x50] sm:$0xff]
    %v37 = vld [vmem:[#allocation2 + $0x58] sm:$0xff]
    %v38 = vld [vmem:[#allocation2 + $0x60] sm:$0xff]
    %v39 = vld [vmem:[#allocation2 + $0x68] sm:$0xff]
    %v40 = vld [vmem:[#allocation2 + $0x70] sm:$0xff]
    %v41 = vld [vmem:[#allocation2 + $0x78] sm:$0xff]
    %42 = vmatprep.subr.mxu0 0.0
    %43 = vmatpush1.xpose.msra.mxu0 %v26
    %44 = vmatprep.subr.mxu0 0.0
    %45 = vmatpush1.xpose.msra.mxu0 %v27
    %46 = vmatprep.subr.mxu0 0.0
    %47 = vmatpush1.xpose.msra.mxu0 %v28
    %48 = vmatprep.subr.mxu0 0.0
    %49 = vmatpush1.xpose.msra.mxu0 %v29
    %50 = vmatprep.subr.mxu0 0.0
    %51 = vmatpush1.xpose.msra.mxu0 %v30
    %52 = vmatprep.subr.mxu0 0.0
    %53 = vmatpush1.xpose.msra.mxu0 %v31
    %54 = vmatprep.subr.mxu0 0.0
    %55 = vmatpush1.xpose.msra.mxu0 %v32
    %56 = vmatprep.subr.mxu0 0.0
    %57 = vmatpush1.xpose.msra.mxu0 %v33
    %58 = vmatprep.subr.mxu0 0.0
    %59 = vmatpush1.xpose.msra.mxu0 %v34
    %60 = vmatprep.subr.mxu0 0.0
    %61 = vmatpush1.xpose.msra.mxu0 %v35
    %62 = vmatprep.subr.mxu0 0.0
    %63 = vmatpush1.xpose.msra.mxu0 %v36
    %64 = vmatprep.subr.mxu0 0.0
    %65 = vmatpush1.xpose.msra.mxu0 %v37
    %66 = vmatprep.subr.mxu0 0.0
    %67 = vmatpush1.xpose.msra.mxu0 %v38
    %68 = vmatprep.subr.mxu0 0.0
    %69 = vmatpush1.xpose.msra.mxu0 %v39
    %70 = vmatprep.subr.mxu0 0.0
    %71 = vmatpush1.xpose.msra.mxu0 %v40
    %72 = vmatprep.subr.mxu0 0.0
    %73 = vmatpush1.xpose.msra.mxu0 %v41
    %74 = vmatprep.subr.mxu0 0.0
    %75 = vmatpush1.xpose.msra.mxu0 0.0
    %76 = vmatprep.subr.mxu0 0.0
    %77 = vmatpush1.xpose.msra.mxu0 0.0
    %78 = vmatprep.subr.mxu0 0.0
    %79 = vmatpush1.xpose.msra.mxu0 0.0
    %80 = vmatprep.subr.mxu0 0.0
    %81 = vmatpush1.xpose.msra.mxu0 0.0
    %82 = vmatprep.subr.mxu0 0.0
    %83 = vmatpush1.xpose.msra.mxu0 0.0
    %84 = vmatprep.subr.mxu0 0.0
    %85 = vmatpush1.xpose.msra.mxu0 0.0
    %86 = vmatprep.subr.mxu0 0.0
    %87 = vmatpush1.xpose.msra.mxu0 0.0
    %88 = vmatprep.subr.mxu0 0.0
    %89 = vmatpush1.xpose.msra.mxu0 0.0
    %90 = vmatprep.subr.mxu0 0.0
    %91 = vmatpush1.xpose.msra.mxu0 0.0
    %92 = vmatprep.subr.mxu0 0.0
    %93 = vmatpush1.xpose.msra.mxu0 0.0
    %94 = vmatprep.subr.mxu0 0.0
    %95 = vmatpush1.xpose.msra.mxu0 0.0
    %96 = vmatprep.subr.mxu0 0.0
    %97 = vmatpush1.xpose.msra.mxu0 0.0
    %98 = vmatprep.subr.mxu0 0.0
    %99 = vmatpush1.xpose.msra.mxu0 0.0
    %100 = vmatprep.subr.mxu0 0.0
    %101 = vmatpush1.xpose.msra.mxu0 0.0
    %102 = vmatprep.subr.mxu0 0.0
    %103 = vmatpush1.xpose.msra.mxu0 0.0
    %104 = vmatprep.subr.mxu0 0.0
    %105 = vmatpush1.xpose.msra.mxu0 0.0
    %106 = vmatprep.mubr.f32.mxu0 0.0
    %107 = vmatmul.mubr.f32.gmra.mrb[0].mxu0 %v25
    %v108 = vpop.f32.mrb[0].mxu0
    %v109 = vadd.f32 0.0, %v108
    %v110 = vpop.f32.mrb[0].mxu0
    %111 = vdwg.mxu0
    %112 = vst [vmem:[%s2] sm:$0xff] %v109
    // Predicated region
    $region14: #{forward.1} parent=1 // pred_check
      _
    $region15: #{forward.1} parent=1 // pred_check_branch
      %114 = sbr.rel (0) target = $region17
    $region16: #{forward.1} parent=1 // pred_region
      _
    $region17: #{forward.1} parent=1 // pred_fallthru
      _
    // Predicated region
    $region18: #{forward.1} parent=1 // pred_check
      _
    $region19: #{forward.1} parent=1 // pred_check_branch
      %116 = sbr.rel (0) target = $region21
    $region20: #{forward.1} parent=1 // pred_region
      _
    $region21: #{forward.1} parent=1 // pred_fallthru
      _
    %117 = vsyncpa [#allocation3], 1

</llo_original>
